<compile_context>
chip_gen: v5e
topology: v5e:2x2
jax: 0.10.0
libtpu: 0.0.40
codegen_flags: <defaults>
</compile_context>

<pallas_src>
import jax
import jax.numpy as jnp
from jax.experimental import pallas as pl
from jax.experimental.pallas import tpu as pltpu


def _round_up(x, m):
    return (x + m - 1) // m * m


def _cdiv(a, b):
    return (a + b - 1) // b


def _vmem_cap_bytes():
    # Generation-aware VMEM cap: ~75% of physical (v5e/v6e: 128 MiB -> 96 MiB,
    # v7x: 64 MiB -> 48 MiB).  Conservative fallback if the query fails.
    try:
        cap = int(pltpu.get_tpu_info().vmem_capacity_bytes) * 3 // 4
        return max(cap, 32 << 20)
    except Exception:
        return 48 << 20


def mlp_head_kernel(img_ref, txt_ref,
                    w1i_ref, w1t_ref, b1_ref,
                    w2_ref, b2_ref,
                    w3_ref, b3_ref,
                    out_ref):
    cdt = w1i_ref.dtype  # bf16 compute dtype for the MXU operands

    # In-kernel cast of f32 embeddings -> bf16 (VPU cast hides under the MXU).
    img = img_ref[...].astype(cdt)
    txt = txt_ref[...].astype(cdt)

    # fc1 on concat([img, txt], dim=1) == img @ W1_img + txt @ W1_txt
    h1 = (jnp.dot(img, w1i_ref[...], preferred_element_type=jnp.float32)
          + jnp.dot(txt, w1t_ref[...], preferred_element_type=jnp.float32)
          + b1_ref[...])
    h1 = jnp.maximum(h1, 0.0)                      # ReLU (f32 accumulator)

    h2 = (jnp.dot(h1.astype(cdt), w2_ref[...],
                  preferred_element_type=jnp.float32)
          + b2_ref[...])
    h2 = jnp.maximum(h2, 0.0)                      # ReLU (f32)

    logits = (jnp.dot(h2.astype(cdt), w3_ref[...],
                      preferred_element_type=jnp.float32)
              + b3_ref[...])
    out_ref[...] = logits.astype(out_ref.dtype)


def prepare_head_params(params, dtype=jnp.bfloat16):
    """One-time pad + cast of the frozen MLP-head weights (hoisted out of forward).

    params: dict with w1_img/w1_txt ([H, D]), w2 ([D, D]), w3 ([D, C]) and
    biases b1/b2/b3 ([1, D]/[1, D]/[1, C]) in f32.
    """
    H = params["w1_img"].shape[0]
    D = params["w2"].shape[0]
    C = params["w3"].shape[1]
    Hp, Dp, Cp = _round_up(H, 128), _round_up(D, 128), _round_up(C, 128)
    # NOTE: for toy hidden dims (<=128) on v6e/v7x one could pad Hp/Dp to 256
    # to better fill the 256x256 MXU; real CLIP dims (512/768) already qualify.

    def pad2(a, r, c, dt):
        a = a.astype(dt)
        return jnp.pad(a, ((0, r - a.shape[0]), (0, c - a.shape[1])))

    return {
        "H": H, "D": D, "C": C, "Hp": Hp, "Dp": Dp, "Cp": Cp,
        "w1_img": pad2(params["w1_img"], Hp, Dp, dtype),
        "w1_txt": pad2(params["w1_txt"], Hp, Dp, dtype),
        "w2": pad2(params["w2"], Dp, Dp, dtype),
        "w3": pad2(params["w3"], Dp, Cp, dtype),
        "b1": pad2(params["b1"], 1, Dp, jnp.float32),
        "b2": pad2(params["b2"], 1, Dp, jnp.float32),
        "b3": pad2(params["b3"], 1, Cp, jnp.float32),
    }


def clip_classifier_head(image_embeds, text_embeds, prepared, *, block_b=1024):
    """Runs the concat_mlp classifier head as a batch-tiled Pallas kernel.

    image_embeds, text_embeds: [B, H] float32 (CLIP projection outputs)
    prepared: output of prepare_head_params (pre-padded, bf16 weights).
    """
    B, H = image_embeds.shape
    assert H == prepared["H"]
    D, C = prepared["D"], prepared["C"]
    Hp, Dp, Cp = prepared["Hp"], prepared["Dp"], prepared["Cp"]

    vmem_cap = _vmem_cap_bytes()

    # Resident (single-buffered) weight/bias footprint.
    weight_bytes = (2 * Hp * Dp + Dp * Dp + Dp * Cp) * 2 + (2 * Dp + Cp) * 4
    # Per-batch-row VMEM: two f32 embedding tiles (double-buffered), f32 logit
    # tile (double-buffered), f32 intermediates h1/h2.
    per_row = 2 * (2 * Hp * 4) + 2 * (Cp * 4) + 2 * (Dp * 4)
    budget = max(vmem_cap - weight_bytes - (4 << 20), per_row * 8)
    tm_vmem = max((budget // per_row) // 8 * 8, 8)

    # Balanced batch tiles, >=2 grid steps (both v7x TensorCores get work),
    # capped by both the target tile and the VMEM-derived bound.
    tm_target = max(min(block_b, tm_vmem), 8)
    ntiles = max(2, _cdiv(B, tm_target))
    TM = _round_up(_cdiv(B, ntiles), 8)
    Bp = TM * ntiles

    # Embeddings stay f32 (cast in-kernel); pad only when shapes require it.
    def pad_emb(a):
        if a.shape == (Bp, Hp):
            return a
        return jnp.pad(a, ((0, Bp - a.shape[0]), (0, Hp - a.shape[1])))

    img = pad_emb(image_embeds)
    txt = pad_emb(text_embeds)

    emb_spec = pl.BlockSpec((TM, Hp), lambda i: (i, 0))
    out_spec = pl.BlockSpec((TM, Cp), lambda i: (i, 0))

    def const_spec(shape):
        # Constant block index + single buffer: weights/biases stay
        # VMEM-resident across batch tiles without a second pipeline buffer.
        return pl.BlockSpec(shape, lambda i: (0, 0), pipeline_mode=pl.Buffered(1))

    footprint = weight_bytes + TM * per_row + (2 << 20)
    vmem_bytes = int(min(max(footprint, 16 << 20), vmem_cap))

    flops = 2 * B * (2 * H * D + D * D + D * C)
    bytes_accessed = (2 * B * H * 4                            # f32 embeddings
                      + (2 * Hp * Dp + Dp * Dp + Dp * Cp) * 2  # bf16 weights
                      + (2 * Dp + Cp) * 4                      # f32 biases
                      + Bp * Cp * 4)                           # f32 logits

    out = pl.pallas_call(
        mlp_head_kernel,
        out_shape=jax.ShapeDtypeStruct((Bp, Cp), jnp.float32),
        grid=(ntiles,),
        in_specs=[emb_spec, emb_spec,
                  const_spec((Hp, Dp)), const_spec((Hp, Dp)), const_spec((1, Dp)),
                  const_spec((Dp, Dp)), const_spec((1, Dp)),
                  const_spec((Dp, Cp)), const_spec((1, Cp))],
        out_specs=out_spec,
        compiler_params=pltpu.CompilerParams(
            dimension_semantics=("parallel",),
            vmem_limit_bytes=vmem_bytes),
        cost_estimate=pl.CostEstimate(
            flops=flops, transcendentals=0, bytes_accessed=bytes_accessed),
    )(img, txt,
      prepared["w1_img"], prepared["w1_txt"], prepared["b1"],
      prepared["w2"], prepared["b2"],
      prepared["w3"], prepared["b3"])

    return out[:B, :C]


def init_params(key, hidden_size, hidden_dim, num_classes):
    """Deterministic synthetic init of MLPHead(hidden_size*2, hidden_dim, num_classes)."""
    ks = jax.random.split(key, 6)
    in1 = 2 * hidden_size
    scale1 = 1.0 / jnp.sqrt(in1)
    scale2 = 1.0 / jnp.sqrt(hidden_dim)
    w1 = jax.random.uniform(ks[0], (in1, hidden_dim), jnp.float32, -scale1, scale1)
    b1 = jax.random.uniform(ks[1], (1, hidden_dim), jnp.float32, -scale1, scale1)
    w2 = jax.random.uniform(ks[2], (hidden_dim, hidden_dim), jnp.float32, -scale2, scale2)
    b2 = jax.random.uniform(ks[3], (1, hidden_dim), jnp.float32, -scale2, scale2)
    w3 = jax.random.uniform(ks[4], (hidden_dim, num_classes), jnp.float32, -scale2, scale2)
    b3 = jax.random.uniform(ks[5], (1, num_classes), jnp.float32, -scale2, scale2)
    return {
        "w1_img": w1[:hidden_size],   # first half of fc1 weight (acts on image_embeds)
        "w1_txt": w1[hidden_size:],   # second half of fc1 weight (acts on text_embeds)
        "b1": b1, "w2": w2, "b2": b2, "w3": w3, "b3": b3,
    }


def reference_forward(image_embeds, text_embeds, params):
    """Plain-JAX f32 reference of the same forward for a correctness check."""
    w1 = jnp.concatenate([params["w1_img"], params["w1_txt"]], axis=0)
    x = jnp.concatenate([image_embeds, text_embeds], axis=1)
    h = jnp.maximum(x @ w1 + params["b1"], 0.0)
    h = jnp.maximum(h @ params["w2"] + params["b2"], 0.0)
    return h @ params["w3"] + params["b3"]


if __name__ == "__main__":
    # Small synthetic shapes consistent with the module's forward:
    # B=2 examples, CLIP projection/hidden size stand-in H=32,
    # MLP hidden_dim=16, num_classes=8.
    B, H, HIDDEN_DIM, NUM_CLASSES = 2, 32, 16, 8

    key = jax.random.PRNGKey(0)
    k_img, k_txt, k_par = jax.random.split(key, 3)

    # TODO(synk): the pretrained CLIP vision/text towers are not translated;
    # we synthesize (and L2-normalize, as CLIPModel does) the embedding outputs.
    image_embeds = jax.random.normal(k_img, (B, H), jnp.float32)
    text_embeds = jax.random.normal(k_txt, (B, H), jnp.float32)
    image_embeds = image_embeds / jnp.linalg.norm(image_embeds, axis=-1, keepdims=True)
    text_embeds = text_embeds / jnp.linalg.norm(text_embeds, axis=-1, keepdims=True)

    params = init_params(k_par, H, HIDDEN_DIM, NUM_CLASSES)
    # One-time parameter prep (pad + bf16 cast) -- hoisted out of the forward.
    prepared = prepare_head_params(params)
    prepared = jax.tree_util.tree_map(
        lambda x: jax.block_until_ready(x) if isinstance(x, jax.Array) else x,
        prepared)

    logits = clip_classifier_head(image_embeds, text_embeds, prepared)
    logits = jax.block_until_ready(logits)

    ref = reference_forward(image_embeds, text_embeds, params)
    assert logits.shape == (B, NUM_CLASSES)
    # bf16 MXU operands vs f32 reference -> loosened tolerance.
    assert jnp.allclose(logits, ref, atol=2e-2, rtol=2e-2), "mismatch vs reference"

    print("KERNEL_OK")
</pallas_src>

<mosaic_0001>
module attributes {stable_mosaic.version = 11 : i64} {
  func.func @mlp_head_kernel(%arg0: i32, %arg1: memref<8x128xf32, #tpu.memory_space<vmem>>, %arg2: memref<8x128xf32, #tpu.memory_space<vmem>>, %arg3: memref<128x128xbf16, #tpu.memory_space<vmem>>, %arg4: memref<128x128xbf16, #tpu.memory_space<vmem>>, %arg5: memref<1x128xf32, #tpu.memory_space<vmem>>, %arg6: memref<128x128xbf16, #tpu.memory_space<vmem>>, %arg7: memref<1x128xf32, #tpu.memory_space<vmem>>, %arg8: memref<128x128xbf16, #tpu.memory_space<vmem>>, %arg9: memref<1x128xf32, #tpu.memory_space<vmem>>, %arg10: memref<8x128xf32, #tpu.memory_space<vmem>>) attributes {dimension_semantics = [#tpu.dimension_semantics<parallel>], iteration_bounds = array<i64: 2>, scalar_prefetch = 0 : i64, scratch_operands = 0 : i64, tpu.core_type = #tpu.core_type<tc>, window_params = [{transform_indices = @transform_0, window_bounds = array<i64: 8, 128>}, {transform_indices = @transform_1, window_bounds = array<i64: 8, 128>}, {pipeline_mode = #tpu.pipeline_mode<synchronous>, transform_indices = @transform_2, window_bounds = array<i64: 128, 128>}, {pipeline_mode = #tpu.pipeline_mode<synchronous>, transform_indices = @transform_3, window_bounds = array<i64: 128, 128>}, {pipeline_mode = #tpu.pipeline_mode<synchronous>, transform_indices = @transform_4, window_bounds = array<i64: 1, 128>}, {pipeline_mode = #tpu.pipeline_mode<synchronous>, transform_indices = @transform_5, window_bounds = array<i64: 128, 128>}, {pipeline_mode = #tpu.pipeline_mode<synchronous>, transform_indices = @transform_6, window_bounds = array<i64: 1, 128>}, {pipeline_mode = #tpu.pipeline_mode<synchronous>, transform_indices = @transform_7, window_bounds = array<i64: 128, 128>}, {pipeline_mode = #tpu.pipeline_mode<synchronous>, transform_indices = @transform_8, window_bounds = array<i64: 1, 128>}, {transform_indices = @transform_9, window_bounds = array<i64: 8, 128>}]} {
    %c0 = arith.constant 0 : index
    %c0_0 = arith.constant 0 : index
    %0 = vector.load %arg1[%c0, %c0_0] : memref<8x128xf32, #tpu.memory_space<vmem>>, vector<8x128xf32>
    %1 = arith.truncf %0 : vector<8x128xf32> to vector<8x128xbf16>
    %c0_1 = arith.constant 0 : index
    %c0_2 = arith.constant 0 : index
    %2 = vector.load %arg2[%c0_1, %c0_2] : memref<8x128xf32, #tpu.memory_space<vmem>>, vector<8x128xf32>
    %3 = arith.truncf %2 : vector<8x128xf32> to vector<8x128xbf16>
    %c0_3 = arith.constant 0 : index
    %c0_4 = arith.constant 0 : index
    %4 = vector.load %arg3[%c0_3, %c0_4] : memref<128x128xbf16, #tpu.memory_space<vmem>>, vector<128x128xbf16>
    %cst = arith.constant dense<0.000000e+00> : vector<8x128xf32>
    %5 = tpu.matmul %1, %4, %cst {dimension_numbers = #tpu.dot_dimension_numbers<[1], [0], [0], [1], [0, 0, 1, 1], [], []>} : vector<8x128xbf16>, vector<128x128xbf16>, vector<8x128xf32> -> vector<8x128xf32>
    %c0_5 = arith.constant 0 : index
    %c0_6 = arith.constant 0 : index
    %6 = vector.load %arg4[%c0_5, %c0_6] : memref<128x128xbf16, #tpu.memory_space<vmem>>, vector<128x128xbf16>
    %cst_7 = arith.constant dense<0.000000e+00> : vector<8x128xf32>
    %7 = tpu.matmul %3, %6, %cst_7 {dimension_numbers = #tpu.dot_dimension_numbers<[1], [0], [0], [1], [0, 0, 1, 1], [], []>} : vector<8x128xbf16>, vector<128x128xbf16>, vector<8x128xf32> -> vector<8x128xf32>
    %8 = arith.addf %5, %7 : vector<8x128xf32>
    %c0_8 = arith.constant 0 : index
    %c0_9 = arith.constant 0 : index
    %9 = vector.load %arg5[%c0_8, %c0_9] : memref<1x128xf32, #tpu.memory_space<vmem>>, vector<1x128xf32>
    %10 = vector.broadcast %9 : vector<1x128xf32> to vector<8x128xf32>
    %11 = arith.addf %8, %10 : vector<8x128xf32>
    %cst_10 = arith.constant 0.000000e+00 : f32
    %12 = vector.broadcast %cst_10 : f32 to vector<8x128xf32>
    %13 = arith.maximumf %11, %12 : vector<8x128xf32>
    %14 = arith.truncf %13 : vector<8x128xf32> to vector<8x128xbf16>
    %c0_11 = arith.constant 0 : index
    %c0_12 = arith.constant 0 : index
    %15 = vector.load %arg6[%c0_11, %c0_12] : memref<128x128xbf16, #tpu.memory_space<vmem>>, vector<128x128xbf16>
    %cst_13 = arith.constant dense<0.000000e+00> : vector<8x128xf32>
    %16 = tpu.matmul %14, %15, %cst_13 {dimension_numbers = #tpu.dot_dimension_numbers<[1], [0], [0], [1], [0, 0, 1, 1], [], []>} : vector<8x128xbf16>, vector<128x128xbf16>, vector<8x128xf32> -> vector<8x128xf32>
    %c0_14 = arith.constant 0 : index
    %c0_15 = arith.constant 0 : index
    %17 = vector.load %arg7[%c0_14, %c0_15] : memref<1x128xf32, #tpu.memory_space<vmem>>, vector<1x128xf32>
    %18 = vector.broadcast %17 : vector<1x128xf32> to vector<8x128xf32>
    %19 = arith.addf %16, %18 : vector<8x128xf32>
    %cst_16 = arith.constant 0.000000e+00 : f32
    %20 = vector.broadcast %cst_16 : f32 to vector<8x128xf32>
    %21 = arith.maximumf %19, %20 : vector<8x128xf32>
    %22 = arith.truncf %21 : vector<8x128xf32> to vector<8x128xbf16>
    %c0_17 = arith.constant 0 : index
    %c0_18 = arith.constant 0 : index
    %23 = vector.load %arg8[%c0_17, %c0_18] : memref<128x128xbf16, #tpu.memory_space<vmem>>, vector<128x128xbf16>
    %cst_19 = arith.constant dense<0.000000e+00> : vector<8x128xf32>
    %24 = tpu.matmul %22, %23, %cst_19 {dimension_numbers = #tpu.dot_dimension_numbers<[1], [0], [0], [1], [0, 0, 1, 1], [], []>} : vector<8x128xbf16>, vector<128x128xbf16>, vector<8x128xf32> -> vector<8x128xf32>
    %c0_20 = arith.constant 0 : index
    %c0_21 = arith.constant 0 : index
    %25 = vector.load %arg9[%c0_20, %c0_21] : memref<1x128xf32, #tpu.memory_space<vmem>>, vector<1x128xf32>
    %26 = vector.broadcast %25 : vector<1x128xf32> to vector<8x128xf32>
    %27 = arith.addf %24, %26 : vector<8x128xf32>
    %c0_22 = arith.constant 0 : index
    %c0_23 = arith.constant 0 : index
    %28 = vector.load %arg10[%c0_22, %c0_23] : memref<8x128xf32, #tpu.memory_space<vmem>>, vector<8x128xf32>
    tpu.vector_store %arg10[%c0_22, %c0_23], %27 {strides = array<i32>} : memref<8x128xf32, #tpu.memory_space<vmem>>, vector<8x128xf32>,
    return
  }
  func.func @transform_0(%arg0: i32) -> (i32, i32) {
    %c0_i32 = arith.constant 0 : i32
    %c0_i32_0 = arith.constant 0 : i32
    return %arg0, %c0_i32 : i32, i32
  }
  func.func @transform_1(%arg0: i32) -> (i32, i32) {
    %c0_i32 = arith.constant 0 : i32
    %c0_i32_0 = arith.constant 0 : i32
    return %arg0, %c0_i32 : i32, i32
  }
  func.func @transform_2(%arg0: i32) -> (i32, i32) {
    %c0_i32 = arith.constant 0 : i32
    %c0_i32_0 = arith.constant 0 : i32
    %c0_i32_1 = arith.constant 0 : i32
    return %c0_i32, %c0_i32_0 : i32, i32
  }
  func.func @transform_3(%arg0: i32) -> (i32, i32) {
    %c0_i32 = arith.constant 0 : i32
    %c0_i32_0 = arith.constant 0 : i32
    %c0_i32_1 = arith.constant 0 : i32
    return %c0_i32, %c0_i32_0 : i32, i32
  }
  func.func @transform_4(%arg0: i32) -> (i32, i32) {
    %c0_i32 = arith.constant 0 : i32
    %c0_i32_0 = arith.constant 0 : i32
    %c0_i32_1 = arith.constant 0 : i32
    return %c0_i32, %c0_i32_0 : i32, i32
  }
  func.func @transform_5(%arg0: i32) -> (i32, i32) {
    %c0_i32 = arith.constant 0 : i32
    %c0_i32_0 = arith.constant 0 : i32
    %c0_i32_1 = arith.constant 0 : i32
    return %c0_i32, %c0_i32_0 : i32, i32
  }
  func.func @transform_6(%arg0: i32) -> (i32, i32) {
    %c0_i32 = arith.constant 0 : i32
    %c0_i32_0 = arith.constant 0 : i32
    %c0_i32_1 = arith.constant 0 : i32
    return %c0_i32, %c0_i32_0 : i32, i32
  }
  func.func @transform_7(%arg0: i32) -> (i32, i32) {
    %c0_i32 = arith.constant 0 : i32
    %c0_i32_0 = arith.constant 0 : i32
    %c0_i32_1 = arith.constant 0 : i32
    return %c0_i32, %c0_i32_0 : i32, i32
  }
  func.func @transform_8(%arg0: i32) -> (i32, i32) {
    %c0_i32 = arith.constant 0 : i32
    %c0_i32_0 = arith.constant 0 : i32
    %c0_i32_1 = arith.constant 0 : i32
    return %c0_i32, %c0_i32_0 : i32, i32
  }
  func.func @transform_9(%arg0: i32) -> (i32, i32) {
    %c0_i32 = arith.constant 0 : i32
    %c0_i32_0 = arith.constant 0 : i32
    return %arg0, %c0_i32 : i32, i32
  }
}

</mosaic_0001>

<llo_original>
// kernel: tpu_custom_call.1
$region0: #{tpu_custom_call.1}
  #allocation0 [shape = 'u32[]', space=smem, size = 0x4, offset = 0x4, fixed_abs, tag = 'smem constant byte address 0x4 - core index']
  #allocation1 [shape = 'u32[72,128]{1,0:T(1,128)}', space=vmem, size = 0x9000, scoped, tag = 'internal scratch']
  %s0 = inlined_call_operand.hbm [shape: f32[16,128], index: 0, kind: input, shape index: {}]
  %s1 = inlined_call_operand.hbm [shape: f32[16,128], index: 1, kind: input, shape index: {}]
  %s2 = inlined_call_operand.hbm [shape: bf16[128,128], index: 2, kind: input, shape index: {}]
  %s3 = inlined_call_operand.hbm [shape: bf16[128,128], index: 3, kind: input, shape index: {}]
  %s4 = inlined_call_operand.vmem [shape: f32[1,128], index: 4, kind: input, shape index: {}]
  %s5 = inlined_call_operand.hbm [shape: bf16[128,128], index: 5, kind: input, shape index: {}]
  %s6 = inlined_call_operand.vmem [shape: f32[1,128], index: 6, kind: input, shape index: {}]
  %s7 = inlined_call_operand.hbm [shape: bf16[128,128], index: 7, kind: input, shape index: {}]
  %s8 = inlined_call_operand.vmem [shape: f32[1,128], index: 8, kind: input, shape index: {}]
  %s9 = inlined_call_operand.hbm [shape: f32[16,128], index: 9, kind: output, shape index: {}]
  %s10 = sld [smem:[#allocation0]]
  $region93: #{tpu_custom_call.1} parent=0
    _
  %s12 = ssub.s32 1, %s10
  %s13 = scalar_select 0, %s12, %s10
  $region1: #{tpu_custom_call.1} parent=0
    #allocation2 [shape = 'u8[8192]{0}', space=vmem, size = 0x2000, scoped, tag = 'input window, operand 0']
    #allocation3 [shape = 's32[2]{0}', space=sflag, size = 0x8, scoped, tag = 'scoped memory for tpu_custom_call.1']
    #allocation4 [shape = 's32[2]{0}', space=sflag, size = 0x8, scoped, tag = 'scoped memory for tpu_custom_call.1']
    #allocation5 [shape = 'u8[8192]{0}', space=vmem, size = 0x2000, scoped, tag = 'input window, operand 1']
    #allocation6 [shape = 's32[2]{0}', space=sflag, size = 0x8, scoped, tag = 'scoped memory for tpu_custom_call.1']
    #allocation7 [shape = 'u8[32768]{0}', space=vmem, size = 0x8000, scoped, tag = 'input window, operand 2, single buffered']
    #allocation8 [shape = 'u8[32768]{0}', space=vmem, size = 0x8000, scoped, tag = 'input window, operand 3, single buffered']
    #allocation9 [shape = 's32[1]{0}', space=sflag, size = 0x4, scoped, tag = 'scoped memory for tpu_custom_call.1']
    #allocation10 [shape = 'u8[32768]{0}', space=vmem, size = 0x8000, scoped, tag = 'input window, operand 5, single buffered']
    #allocation11 [shape = 'u8[32768]{0}', space=vmem, size = 0x8000, scoped, tag = 'input window, operand 7, single buffered']
    #allocation12 [shape = 's32[1]{0}', space=sflag, size = 0x4, scoped, tag = 'scoped memory for tpu_custom_call.1']
    #allocation13 [shape = 'u8[8192]{0}', space=vmem, size = 0x2000, scoped, tag = 'output window, operand 0']
    %14 = vsyncpa [#allocation3], 0
    %s15 = scalar_lea.sflag [#allocation3], 1
    %16 = vsyncpa %s15, 0
    %17 = vsyncpa [#allocation6], 0
    %s18 = scalar_lea.sflag [#allocation6], 1
    %19 = vsyncpa %s18, 0
    %20 = vsyncpa [#allocation9], 0
    %21 = vsyncpa [#allocation12], 0
    %22 = vsyncpa [#allocation4], 0
    %s23 = scalar_lea.sflag [#allocation4], 1
    %24 = vsyncpa %s23, 0
    loop: start=0, step=1, limit=4
    $region2: #{tpu_custom_call.1} parent=1 // loop_pre_header
      _
    $region3: #{tpu_custom_call.1} parent=1 // loop_header
      %s26 = sphi 0, %s30
      %p27 = scmp.ge.s32.totalorder %s26, 4
      %s36 = sphi 0, %s38
      %s39 = sphi 0, %s36
      %s40 = sphi 0, %s39
      %s56 = sphi 0, %s40
      %s62 = sphi 0, %s64
      %s65 = sphi 0, %s62
      %s66 = sphi 0, %s65
      %s82 = sphi 0, %s66
      %s86 = sphi 0, %s86
      %s88 = sphi 0, %s86
      %s89 = sphi 0, %s88
      %s103 = sphi 0, %s89
      %s107 = sphi 0, %s107
      %s109 = sphi 0, %s107
      %s110 = sphi 0, %s109
      %s124 = sphi 0, %s110
      %s128 = sphi 0, %s128
      %s130 = sphi 0, %s128
      %s131 = sphi 0, %s130
      %s145 = sphi 0, %s131
      %s149 = sphi 0, %s149
      %s151 = sphi 0, %s149
      %s152 = sphi 0, %s151
      %s166 = sphi 0, %s152
      %s170 = sphi 0, %s170
      %s172 = sphi 0, %s170
      %s173 = sphi 0, %s172
      %s187 = sphi 0, %s173
      %s191 = sphi 0, %s191
      %s193 = sphi 0, %s191
      %s194 = sphi 0, %s193
      %s208 = sphi 0, %s194
      %s212 = sphi 0, %s212
      %s214 = sphi 0, %s212
      %s215 = sphi 0, %s214
      %s229 = sphi 0, %s215
      %s235 = sphi 0, %s237
      %s238 = sphi 0, %s235
      %s239 = sphi 0, %s238
      %s255 = sphi 0, %s239
    $region4: #{tpu_custom_call.1} parent=1 // loop_header_branch
      %29 = sbr.rel (%p27) target = $region8
    $region5: #{tpu_custom_call.1} parent=1 // loop_body
      %s31 = ssub.s32 %s26, 1
      %s32 = ssub.s32 %s26, 2
      %s33 = sadd.s32 %s26, 1
      %s34 = ssub.s32 %s26, %s33
      %p35 = scmp.eq.s32.totalorder %s34, 0
      %s37 = sadd.s32 %s36, 1
      %s38 = scalar_select %p35, %s36, %s37
      %p41 = pneg %p35
      %p42 = scmp.eq.s32.totalorder %s26, 1
      %p43 = por %p41, %p42
      %p44 = scmp.ne.s32.totalorder %s36, %s39
      %p45 = scmp.eq.s32.totalorder %s26, 0
      %p46 = por %p44, %p45
      %p47 = scmp.ne.s32.totalorder %s36, %s39
      %p48 = scmp.eq.s32.totalorder %s31, 1
      %p49 = por %p47, %p48
      %p50 = scmp.ne.s32.totalorder %s39, %s40
      %p51 = scmp.eq.s32.totalorder %s31, 0
      %p52 = por %p50, %p51
      %p53 = scmp.ne.s32.totalorder %s39, %s40
      %p54 = scmp.eq.s32.totalorder %s32, 1
      %p55 = por %p53, %p54
      %p57 = scmp.ne.s32.totalorder %s40, %s56
      %p58 = scmp.eq.s32.totalorder %s32, 0
      %p59 = por %p57, %p58
      %s60 = ssub.s32 %s26, %s33
      %p61 = scmp.eq.s32.totalorder %s60, 0
      %s63 = sadd.s32 %s62, 1
      %s64 = scalar_select %p61, %s62, %s63
      %p67 = pneg %p61
      %p68 = scmp.eq.s32.totalorder %s26, 1
      %p69 = por %p67, %p68
      %p70 = scmp.ne.s32.totalorder %s62, %s65
      %p71 = scmp.eq.s32.totalorder %s26, 0
      %p72 = por %p70, %p71
      %p73 = scmp.ne.s32.totalorder %s62, %s65
      %p74 = scmp.eq.s32.totalorder %s31, 1
      %p75 = por %p73, %p74
      %p76 = scmp.ne.s32.totalorder %s65, %s66
      %p77 = scmp.eq.s32.totalorder %s31, 0
      %p78 = por %p76, %p77
      %p79 = scmp.ne.s32.totalorder %s65, %s66
      %p80 = scmp.eq.s32.totalorder %s32, 1
      %p81 = por %p79, %p80
      %p83 = scmp.ne.s32.totalorder %s66, %s82
      %p84 = scmp.eq.s32.totalorder %s32, 0
      %p85 = por %p83, %p84
      %s87 = sadd.s32 %s86, 1
      %p90 = scmp.eq.s32.totalorder %s26, 1
      %p91 = scmp.ne.s32.totalorder %s86, %s88
      %p92 = scmp.eq.s32.totalorder %s26, 0
      %p93 = por %p91, %p92
      %p94 = scmp.ne.s32.totalorder %s86, %s88
      %p95 = scmp.eq.s32.totalorder %s31, 1
      %p96 = por %p94, %p95
      %p97 = scmp.ne.s32.totalorder %s88, %s89
      %p98 = scmp.eq.s32.totalorder %s31, 0
      %p99 = por %p97, %p98
      %p100 = scmp.ne.s32.totalorder %s88, %s89
      %p101 = scmp.eq.s32.totalorder %s32, 1
      %p102 = por %p100, %p101
      %p104 = scmp.ne.s32.totalorder %s89, %s103
      %p105 = scmp.eq.s32.totalorder %s32, 0
      %p106 = por %p104, %p105
      %s108 = sadd.s32 %s107, 1
      %p111 = scmp.eq.s32.totalorder %s26, 1
      %p112 = scmp.ne.s32.totalorder %s107, %s109
      %p113 = scmp.eq.s32.totalorder %s26, 0
      %p114 = por %p112, %p113
      %p115 = scmp.ne.s32.totalorder %s107, %s109
      %p116 = scmp.eq.s32.totalorder %s31, 1
      %p117 = por %p115, %p116
      %p118 = scmp.ne.s32.totalorder %s109, %s110
      %p119 = scmp.eq.s32.totalorder %s31, 0
      %p120 = por %p118, %p119
      %p121 = scmp.ne.s32.totalorder %s109, %s110
      %p122 = scmp.eq.s32.totalorder %s32, 1
      %p123 = por %p121, %p122
      %p125 = scmp.ne.s32.totalorder %s110, %s124
      %p126 = scmp.eq.s32.totalorder %s32, 0
      %p127 = por %p125, %p126
      %s129 = sadd.s32 %s128, 1
      %p132 = scmp.eq.s32.totalorder %s26, 1
      %p133 = scmp.ne.s32.totalorder %s128, %s130
      %p134 = scmp.eq.s32.totalorder %s26, 0
      %p135 = por %p133, %p134
      %p136 = scmp.ne.s32.totalorder %s128, %s130
      %p137 = scmp.eq.s32.totalorder %s31, 1
      %p138 = por %p136, %p137
      %p139 = scmp.ne.s32.totalorder %s130, %s131
      %p140 = scmp.eq.s32.totalorder %s31, 0
      %p141 = por %p139, %p140
      %p142 = scmp.ne.s32.totalorder %s130, %s131
      %p143 = scmp.eq.s32.totalorder %s32, 1
      %p144 = por %p142, %p143
      %p146 = scmp.ne.s32.totalorder %s131, %s145
      %p147 = scmp.eq.s32.totalorder %s32, 0
      %p148 = por %p146, %p147
      %s150 = sadd.s32 %s149, 1
      %p153 = scmp.eq.s32.totalorder %s26, 1
      %p154 = scmp.ne.s32.totalorder %s149, %s151
      %p155 = scmp.eq.s32.totalorder %s26, 0
      %p156 = por %p154, %p155
      %p157 = scmp.ne.s32.totalorder %s149, %s151
      %p158 = scmp.eq.s32.totalorder %s31, 1
      %p159 = por %p157, %p158
      %p160 = scmp.ne.s32.totalorder %s151, %s152
      %p161 = scmp.eq.s32.totalorder %s31, 0
      %p162 = por %p160, %p161
      %p163 = scmp.ne.s32.totalorder %s151, %s152
      %p164 = scmp.eq.s32.totalorder %s32, 1
      %p165 = por %p163, %p164
      %p167 = scmp.ne.s32.totalorder %s152, %s166
      %p168 = scmp.eq.s32.totalorder %s32, 0
      %p169 = por %p167, %p168
      %s171 = sadd.s32 %s170, 1
      %p174 = scmp.eq.s32.totalorder %s26, 1
      %p175 = scmp.ne.s32.totalorder %s170, %s172
      %p176 = scmp.eq.s32.totalorder %s26, 0
      %p177 = por %p175, %p176
      %p178 = scmp.ne.s32.totalorder %s170, %s172
      %p179 = scmp.eq.s32.totalorder %s31, 1
      %p180 = por %p178, %p179
      %p181 = scmp.ne.s32.totalorder %s172, %s173
      %p182 = scmp.eq.s32.totalorder %s31, 0
      %p183 = por %p181, %p182
      %p184 = scmp.ne.s32.totalorder %s172, %s173
      %p185 = scmp.eq.s32.totalorder %s32, 1
      %p186 = por %p184, %p185
      %p188 = scmp.ne.s32.totalorder %s173, %s187
      %p189 = scmp.eq.s32.totalorder %s32, 0
      %p190 = por %p188, %p189
      %s192 = sadd.s32 %s191, 1
      %p195 = scmp.eq.s32.totalorder %s26, 1
      %p196 = scmp.ne.s32.totalorder %s191, %s193
      %p197 = scmp.eq.s32.totalorder %s26, 0
      %p198 = por %p196, %p197
      %p199 = scmp.ne.s32.totalorder %s191, %s193
      %p200 = scmp.eq.s32.totalorder %s31, 1
      %p201 = por %p199, %p200
      %p202 = scmp.ne.s32.totalorder %s193, %s194
      %p203 = scmp.eq.s32.totalorder %s31, 0
      %p204 = por %p202, %p203
      %p205 = scmp.ne.s32.totalorder %s193, %s194
      %p206 = scmp.eq.s32.totalorder %s32, 1
      %p207 = por %p205, %p206
      %p209 = scmp.ne.s32.totalorder %s194, %s208
      %p210 = scmp.eq.s32.totalorder %s32, 0
      %p211 = por %p209, %p210
      %s213 = sadd.s32 %s212, 1
      %p216 = scmp.eq.s32.totalorder %s26, 1
      %p217 = scmp.ne.s32.totalorder %s212, %s214
      %p218 = scmp.eq.s32.totalorder %s26, 0
      %p219 = por %p217, %p218
      %p220 = scmp.ne.s32.totalorder %s212, %s214
      %p221 = scmp.eq.s32.totalorder %s31, 1
      %p222 = por %p220, %p221
      %p223 = scmp.ne.s32.totalorder %s214, %s215
      %p224 = scmp.eq.s32.totalorder %s31, 0
      %p225 = por %p223, %p224
      %p226 = scmp.ne.s32.totalorder %s214, %s215
      %p227 = scmp.eq.s32.totalorder %s32, 1
      %p228 = por %p226, %p227
      %p230 = scmp.ne.s32.totalorder %s215, %s229
      %p231 = scmp.eq.s32.totalorder %s32, 0
      %p232 = por %p230, %p231
      %s233 = ssub.s32 %s26, %s33
      %p234 = scmp.eq.s32.totalorder %s233, 0
      %s236 = sadd.s32 %s235, 1
      %s237 = scalar_select %p234, %s235, %s236
      %p240 = pneg %p234
      %p241 = scmp.eq.s32.totalorder %s26, 1
      %p242 = por %p240, %p241
      %p243 = scmp.ne.s32.totalorder %s235, %s238
      %p244 = scmp.eq.s32.totalorder %s26, 0
      %p245 = por %p243, %p244
      %p246 = scmp.ne.s32.totalorder %s235, %s238
      %p247 = scmp.eq.s32.totalorder %s31, 1
      %p248 = por %p246, %p247
      %p249 = scmp.ne.s32.totalorder %s238, %s239
      %p250 = scmp.eq.s32.totalorder %s31, 0
      %p251 = por %p249, %p250
      %p252 = scmp.ne.s32.totalorder %s238, %s239
      %p253 = scmp.eq.s32.totalorder %s32, 1
      %p254 = por %p252, %p253
      %p256 = scmp.ne.s32.totalorder %s239, %s255
      %p257 = scmp.eq.s32.totalorder %s32, 0
      %p258 = por %p256, %p257
      %p259 = scmp.le.s32.totalorder 1, %s26
      %p260 = scmp.lt.s32.totalorder %s26, 3
      %p261 = pnand %p259, %p260
      %p262 = pneg %p261
      // Predicated region
      $region9: #{tpu_custom_call.1} parent=5 // pred_check
        _
      $region10: #{tpu_custom_call.1} parent=5 // pred_check_branch
        %264 = sbr.rel (%p261) target = $region12
      $region11: #{tpu_custom_call.1} parent=5 // pred_region
        %s265 = ssub.s32 %s26, 1
        // Predicated region
        $region13: #{tpu_custom_call.1} parent=11 // pred_check
          %p266 = pneg %p99
        $region14: #{tpu_custom_call.1} parent=11 // pred_check_branch
          %268 = sbr.rel (%p266) target = $region16
        $region15: #{tpu_custom_call.1} parent=11 // pred_region
          %270 = vsyncadd [#allocation6], 0
          %s271 = sshll.u32 %s2, 4
          %s272 = int_to_ptr.hbm [resolvable:$true] %s271
          %s273 = sshll.u32 [#allocation7], 4
          %s274 = int_to_ptr.vmem [resolvable:$true] %s273
          %279 = dma.hbm_to_vmem [thread:$0]  %s272, 1024, %s274, [#allocation6], 64, 64, 4
        $region16: #{tpu_custom_call.1} parent=11 // pred_fallthru
          _
        // Predicated region
        $region17: #{tpu_custom_call.1} parent=11 // pred_check
          %p280 = pneg %p120
        $region18: #{tpu_custom_call.1} parent=11 // pred_check_branch
          %282 = sbr.rel (%p280) target = $region20
        $region19: #{tpu_custom_call.1} parent=11 // pred_region
          %284 = vsyncadd [#allocation9], 0
          %s285 = sshll.u32 %s3, 4
          %s286 = int_to_ptr.hbm [resolvable:$true] %s285
          %s287 = sshll.u32 [#allocation8], 4
          %s288 = int_to_ptr.vmem [resolvable:$true] %s287
          %293 = dma.hbm_to_vmem [thread:$0]  %s286, 1024, %s288, [#allocation9], 64, 64, 4
        $region20: #{tpu_custom_call.1} parent=11 // pred_fallthru
          _
        // Predicated region
        $region21: #{tpu_custom_call.1} parent=11 // pred_check
          %p294 = pneg %p141
        $region22: #{tpu_custom_call.1} parent=11 // pred_check_branch
          %296 = sbr.rel (%p294) target = $region24
        $region23: #{tpu_custom_call.1} parent=11 // pred_region
          _
        $region24: #{tpu_custom_call.1} parent=11 // pred_fallthru
          _
        // Predicated region
        $region25: #{tpu_custom_call.1} parent=11 // pred_check
          %p297 = pneg %p162
        $region26: #{tpu_custom_call.1} parent=11 // pred_check_branch
          %299 = sbr.rel (%p297) target = $region28
        $region27: #{tpu_custom_call.1} parent=11 // pred_region
          %301 = vsyncadd [#allocation9], 0
          %s302 = sshll.u32 %s5, 4
          %s303 = int_to_ptr.hbm [resolvable:$true] %s302
          %s304 = sshll.u32 [#allocation10], 4
          %s305 = int_to_ptr.vmem [resolvable:$true] %s304
          %310 = dma.hbm_to_vmem [thread:$0]  %s303, 1024, %s305, [#allocation9], 64, 64, 4
        $region28: #{tpu_custom_call.1} parent=11 // pred_fallthru
          _
        // Predicated region
        $region29: #{tpu_custom_call.1} parent=11 // pred_check
          %p311 = pneg %p183
        $region30: #{tpu_custom_call.1} parent=11 // pred_check_branch
          %313 = sbr.rel (%p311) target = $region32
        $region31: #{tpu_custom_call.1} parent=11 // pred_region
          _
        $region32: #{tpu_custom_call.1} parent=11 // pred_fallthru
          _
        // Predicated region
        $region33: #{tpu_custom_call.1} parent=11 // pred_check
          %p314 = pneg %p204
        $region34: #{tpu_custom_call.1} parent=11 // pred_check_branch
          %316 = sbr.rel (%p314) target = $region36
        $region35: #{tpu_custom_call.1} parent=11 // pred_region
          %318 = vsyncadd [#allocation12], 0
          %s319 = sshll.u32 %s7, 4
          %s320 = int_to_ptr.hbm [resolvable:$true] %s319
          %s321 = sshll.u32 [#allocation11], 4
          %s322 = int_to_ptr.vmem [resolvable:$true] %s321
          %327 = dma.hbm_to_vmem [thread:$0]  %s320, 1024, %s322, [#allocation12], 64, 64, 4
        $region36: #{tpu_custom_call.1} parent=11 // pred_fallthru
          _
        // Predicated region
        $region37: #{tpu_custom_call.1} parent=11 // pred_check
          %p328 = pneg %p225
        $region38: #{tpu_custom_call.1} parent=11 // pred_check_branch
          %330 = sbr.rel (%p328) target = $region40
        $region39: #{tpu_custom_call.1} parent=11 // pred_region
          _
        $region40: #{tpu_custom_call.1} parent=11 // pred_fallthru
          _
      $region12: #{tpu_custom_call.1} parent=5 // pred_fallthru
        _
      %p331 = scmp.lt.s32.totalorder %s26, 2
      // Predicated region
      $region41: #{tpu_custom_call.1} parent=5 // pred_check
        %p332 = pneg %p331
      $region42: #{tpu_custom_call.1} parent=5 // pred_check_branch
        %334 = sbr.rel (%p332) target = $region44
      $region43: #{tpu_custom_call.1} parent=5 // pred_region
        // Predicated region
        $region45: #{tpu_custom_call.1} parent=43 // pred_check
          %p335 = pneg %p46
        $region46: #{tpu_custom_call.1} parent=43 // pred_check_branch
          %337 = sbr.rel (%p335) target = $region48
        $region47: #{tpu_custom_call.1} parent=43 // pred_region
          %s338 = sand.u32 %s36, 1
          %s339 = scalar_lea.sflag [#allocation3], %s338
          %s340 = sand.u32 %s36, 1
          %s341 = smul.addr %s340, 8
          %s342 = scalar_lea.vmem [#allocation2], %s341
          %344 = vsyncadd %s339, 0
          %s345 = smul.addr %s26, 8
          %s346 = scalar_lea.hbm %s0, %s345
          %s348 = sshll.u32 %s346, 4
          %s349 = int_to_ptr.hbm [resolvable:$true] %s348
          %s350 = sshll.u32 %s342, 4
          %s351 = int_to_ptr.vmem [resolvable:$true] %s350
          %353 = dma.hbm_to_vmem [thread:$0]  %s349, 128, %s351, %s339
        $region48: #{tpu_custom_call.1} parent=43 // pred_fallthru
          _
        // Predicated region
        $region49: #{tpu_custom_call.1} parent=43 // pred_check
          %p354 = pneg %p72
        $region50: #{tpu_custom_call.1} parent=43 // pred_check_branch
          %356 = sbr.rel (%p354) target = $region52
        $region51: #{tpu_custom_call.1} parent=43 // pred_region
          %s357 = sand.u32 %s26, 1
          %s358 = scalar_lea.sflag [#allocation6], %s357
          %s359 = sand.u32 %s62, 1
          %s360 = smul.addr %s359, 8
          %s361 = scalar_lea.vmem [#allocation5], %s360
          %363 = vsyncadd %s358, 0
          %s364 = smul.addr %s26, 8
          %s365 = scalar_lea.hbm %s1, %s364
          %s367 = sshll.u32 %s365, 4
          %s368 = int_to_ptr.hbm [resolvable:$true] %s367
          %s369 = sshll.u32 %s361, 4
          %s370 = int_to_ptr.vmem [resolvable:$true] %s369
          %372 = dma.hbm_to_vmem [thread:$0]  %s368, 128, %s370, %s358
        $region52: #{tpu_custom_call.1} parent=43 // pred_fallthru
          _
      $region44: #{tpu_custom_call.1} parent=5 // pred_fallthru
        _
      %p373 = scmp.le.s32.totalorder 1, %s26
      %p374 = scmp.lt.s32.totalorder %s26, 3
      %p375 = pnand %p373, %p374
      %p376 = pneg %p375
      // Predicated region
      $region53: #{tpu_custom_call.1} parent=5 // pred_check
        _
      $region54: #{tpu_custom_call.1} parent=5 // pred_check_branch
        %378 = sbr.rel (%p375) target = $region56
      $region55: #{tpu_custom_call.1} parent=5 // pred_region
        %s379 = ssub.s32 %s26, 1
        %s380 = sand.u32 %s39, 1
        %s381 = scalar_lea.sflag [#allocation3], %s380
        %s382 = sand.u32 %s39, 1
        %s383 = smul.addr %s382, 8
        %s384 = scalar_lea.vmem [#allocation2], %s383
        // Predicated region
        $region57: #{tpu_custom_call.1} parent=55 // pred_check
          %p385 = pneg %p52
        $region58: #{tpu_custom_call.1} parent=55 // pred_check_branch
          %387 = sbr.rel (%p385) target = $region60
        $region59: #{tpu_custom_call.1} parent=55 // pred_region
          %389 = dma.done %s381, 128
        $region60: #{tpu_custom_call.1} parent=55 // pred_fallthru
          _
        %s390 = sand.u32 %s31, 1
        %s391 = scalar_lea.sflag [#allocation6], %s390
        %s392 = sand.u32 %s65, 1
        %s393 = smul.addr %s392, 8
        %s394 = scalar_lea.vmem [#allocation5], %s393
        // Predicated region
        $region61: #{tpu_custom_call.1} parent=55 // pred_check
          %p395 = pneg %p78
        $region62: #{tpu_custom_call.1} parent=55 // pred_check_branch
          %397 = sbr.rel (%p395) target = $region64
        $region63: #{tpu_custom_call.1} parent=55 // pred_region
          %399 = dma.done %s391, 128
        $region64: #{tpu_custom_call.1} parent=55 // pred_fallthru
          _
        // Predicated region
        $region65: #{tpu_custom_call.1} parent=55 // pred_check
          %p400 = pneg %p99
        $region66: #{tpu_custom_call.1} parent=55 // pred_check_branch
          %402 = sbr.rel (%p400) target = $region68
        $region67: #{tpu_custom_call.1} parent=55 // pred_region
          %404 = dma.done [#allocation6], 1024
        $region68: #{tpu_custom_call.1} parent=55 // pred_fallthru
          _
        // Predicated region
        $region69: #{tpu_custom_call.1} parent=55 // pred_check
          %p405 = pneg %p120
        $region70: #{tpu_custom_call.1} parent=55 // pred_check_branch
          %407 = sbr.rel (%p405) target = $region72
        $region71: #{tpu_custom_call.1} parent=55 // pred_region
          %409 = dma.done [#allocation9], 1024
        $region72: #{tpu_custom_call.1} parent=55 // pred_fallthru
          _
        // Predicated region
        $region73: #{tpu_custom_call.1} parent=55 // pred_check
          %p410 = pneg %p162
        $region74: #{tpu_custom_call.1} parent=55 // pred_check_branch
          %412 = sbr.rel (%p410) target = $region76
        $region75: #{tpu_custom_call.1} parent=55 // pred_region
          %414 = dma.done [#allocation9], 1024
        $region76: #{tpu_custom_call.1} parent=55 // pred_fallthru
          _
        // Predicated region
        $region77: #{tpu_custom_call.1} parent=55 // pred_check
          %p415 = pneg %p204
        $region78: #{tpu_custom_call.1} parent=55 // pred_check_branch
          %417 = sbr.rel (%p415) target = $region80
        $region79: #{tpu_custom_call.1} parent=55 // pred_region
          %419 = dma.done [#allocation12], 1024
        $region80: #{tpu_custom_call.1} parent=55 // pred_fallthru
          _
        %s420 = sand.u32 %s39, 1
        %s421 = scalar_lea.sflag [#allocation3], %s420
        %s422 = sand.u32 %s39, 1
        %s423 = smul.addr %s422, 8
        %s424 = scalar_lea.vmem [#allocation2], %s423
        %p425 = pneg %p52
        %p426 = pneg %p49
        %s427 = sand.u32 %s31, 1
        %s428 = scalar_lea.sflag [#allocation6], %s427
        %s429 = sand.u32 %s65, 1
        %s430 = smul.addr %s429, 8
        %s431 = scalar_lea.vmem [#allocation5], %s430
        %p432 = pneg %p78
        %p433 = pneg %p75
        %p434 = pneg %p99
        %p435 = pneg %p96
        %p436 = pneg %p120
        %p437 = pneg %p117
        %p438 = pneg %p141
        %p439 = pneg %p138
        %p440 = pneg %p162
        %p441 = pneg %p159
        %p442 = pneg %p183
        %p443 = pneg %p180
        %p444 = pneg %p204
        %p445 = pneg %p201
        %p446 = pneg %p225
        %p447 = pneg %p222
        %p448 = pneg %p251
        %p449 = pneg %p248
        %s450 = sand.u32 %s238, 1
        %s451 = scalar_lea.sflag [#allocation4], %s450
        %s452 = sand.u32 %s238, 1
        %s453 = smul.addr %s452, 8
        %s454 = scalar_lea.vmem [#allocation13], %s453
        %v455 = vld [vmem:[%s384] sm:$0xff]
        %v456 = vpack.c.bf16 %v455, %v455
        %v457 = vld [vmem:[%s394] sm:$0xff]
        %v458 = vpack.c.bf16 %v457, %v457
        %v459 = vld [vmem:[#allocation7] sm:$0xf]
        %v460 = vld [vmem:[#allocation7 + $0x4] sm:$0xf]
        %v461 = vld [vmem:[#allocation7 + $0x8] sm:$0xf]
        %v462 = vld [vmem:[#allocation7 + $0xc] sm:$0xf]
        %v463 = vld [vmem:[#allocation7 + $0x10] sm:$0xf]
        %v464 = vld [vmem:[#allocation7 + $0x14] sm:$0xf]
        %v465 = vld [vmem:[#allocation7 + $0x18] sm:$0xf]
        %v466 = vld [vmem:[#allocation7 + $0x1c] sm:$0xf]
        %v467 = vld [vmem:[#allocation7 + $0x20] sm:$0xf]
        %v468 = vld [vmem:[#allocation7 + $0x24] sm:$0xf]
        %v469 = vld [vmem:[#allocation7 + $0x28] sm:$0xf]
        %v470 = vld [vmem:[#allocation7 + $0x2c] sm:$0xf]
        %v471 = vld [vmem:[#allocation7 + $0x30] sm:$0xf]
        %v472 = vld [vmem:[#allocation7 + $0x34] sm:$0xf]
        %v473 = vld [vmem:[#allocation7 + $0x38] sm:$0xf]
        %v474 = vld [vmem:[#allocation7 + $0x3c] sm:$0xf]
        %v475 = vld [vmem:[#allocation8] sm:$0xf]
        %v476 = vld [vmem:[#allocation8 + $0x4] sm:$0xf]
        %v477 = vld [vmem:[#allocation8 + $0x8] sm:$0xf]
        %v478 = vld [vmem:[#allocation8 + $0xc] sm:$0xf]
        %v479 = vld [vmem:[#allocation8 + $0x10] sm:$0xf]
        %v480 = vld [vmem:[#allocation8 + $0x14] sm:$0xf]
        %v481 = vld [vmem:[#allocation8 + $0x18] sm:$0xf]
        %v482 = vld [vmem:[#allocation8 + $0x1c] sm:$0xf]
        %v483 = vld [vmem:[#allocation8 + $0x20] sm:$0xf]
        %v484 = vld [vmem:[#allocation8 + $0x24] sm:$0xf]
        %v485 = vld [vmem:[#allocation8 + $0x28] sm:$0xf]
        %v486 = vld [vmem:[#allocation8 + $0x2c] sm:$0xf]
        %v487 = vld [vmem:[#allocation8 + $0x30] sm:$0xf]
        %v488 = vld [vmem:[#allocation8 + $0x34] sm:$0xf]
        %v489 = vld [vmem:[#allocation8 + $0x38] sm:$0xf]
        %v490 = vld [vmem:[#allocation8 + $0x3c] sm:$0xf]
        %v507 = vunpack.c.l.b16 %v475
        %v508 = vunpack.c.l.b16 %v476
        %v509 = vunpack.c.l.b16 %v477
        %v510 = vunpack.c.l.b16 %v478
        %v511 = vunpack.c.l.b16 %v479
        %v512 = vunpack.c.l.b16 %v480
        %v513 = vunpack.c.l.b16 %v481
        %v514 = vunpack.c.l.b16 %v482
        %v515 = vunpack.c.l.b16 %v483
        %v516 = vunpack.c.l.b16 %v484
        %v517 = vunpack.c.l.b16 %v485
        %v518 = vunpack.c.l.b16 %v486
        %v519 = vunpack.c.l.b16 %v487
        %v520 = vunpack.c.l.b16 %v488
        %v521 = vunpack.c.l.b16 %v489
        %v522 = vunpack.c.l.b16 %v490
        %v523 = vpack.c.b16 %v508, %v507
        %v524 = vpack.c.b16 %v510, %v509
        %v525 = vpack.c.b16 %v512, %v511
        %v526 = vpack.c.b16 %v514, %v513
        %v527 = vpack.c.b16 %v516, %v515
        %v528 = vpack.c.b16 %v518, %v517
        %v529 = vpack.c.b16 %v520, %v519
        %v530 = vpack.c.b16 %v522, %v521
        %539 = vmatpush.bf16.msra.mxu0 %v530
        %540 = vmatpush.bf16.msra.mxu0 %v529
        %541 = vmatpush.bf16.msra.mxu0 %v528
        %542 = vmatpush.bf16.msra.mxu0 %v527
        %543 = vmatpush.bf16.msra.mxu0 %v526
        %544 = vmatpush.bf16.msra.mxu0 %v525
        %545 = vmatpush.bf16.msra.mxu0 %v524
        %546 = vmatpush.bf16.msra.mxu0 %v523
        %547 = vmatmul.bf16.gmra.mxu0 %v458
        %v548 = vpop.f32.mrf.mxu0
        %v549 = vadd.f32 0.0, %v548
        %v550 = vpop.f32.mrf.mxu0
        %551 = vdwg.mxu0
        %v568 = vunpack.c.l.b16 %v459
        %v569 = vunpack.c.l.b16 %v460
        %v570 = vunpack.c.l.b16 %v461
        %v571 = vunpack.c.l.b16 %v462
        %v572 = vunpack.c.l.b16 %v463
        %v573 = vunpack.c.l.b16 %v464
        %v574 = vunpack.c.l.b16 %v465
        %v575 = vunpack.c.l.b16 %v466
        %v576 = vunpack.c.l.b16 %v467
        %v577 = vunpack.c.l.b16 %v468
        %v578 = vunpack.c.l.b16 %v469
        %v579 = vunpack.c.l.b16 %v470
        %v580 = vunpack.c.l.b16 %v471
        %v581 = vunpack.c.l.b16 %v472
        %v582 = vunpack.c.l.b16 %v473
        %v583 = vunpack.c.l.b16 %v474
        %v584 = vpack.c.b16 %v569, %v568
        %v585 = vpack.c.b16 %v571, %v570
        %v586 = vpack.c.b16 %v573, %v572
        %v587 = vpack.c.b16 %v575, %v574
        %v588 = vpack.c.b16 %v577, %v576
        %v589 = vpack.c.b16 %v579, %v578
        %v590 = vpack.c.b16 %v581, %v580
        %v591 = vpack.c.b16 %v583, %v582
        %600 = vmatpush.bf16.msra.mxu0 %v591
        %601 = vmatpush.bf16.msra.mxu0 %v590
        %602 = vmatpush.bf16.msra.mxu0 %v589
        %603 = vmatpush.bf16.msra.mxu0 %v588
        %604 = vmatpush.bf16.msra.mxu0 %v587
        %605 = vmatpush.bf16.msra.mxu0 %v586
        %606 = vmatpush.bf16.msra.mxu0 %v585
        %607 = vmatpush.bf16.msra.mxu0 %v584
        %608 = vmatmul.bf16.gmra.mxu0 %v456
        %v609 = vpop.f32.mrf.mxu0
        %v610 = vadd.f32 %v549, %v609
        %v611 = vpop.f32.mrf.mxu0
        %612 = vdwg.mxu0
        %v613 = vld [vmem:[%s4] sm:$0x1]
        %v615 = vperm.slane %v613, 0
        %v617 = vadd.f32 %v610, %v615
        %v618 = vmax.f32 %v617, 0.0
        %v619 = vpack.c.bf16 %v618, %v618
        %v620 = vld [vmem:[#allocation10] sm:$0xf]
        %v621 = vld [vmem:[#allocation10 + $0x4] sm:$0xf]
        %v622 = vld [vmem:[#allocation10 + $0x8] sm:$0xf]
        %v623 = vld [vmem:[#allocation10 + $0xc] sm:$0xf]
        %v624 = vld [vmem:[#allocation10 + $0x10] sm:$0xf]
        %v625 = vld [vmem:[#allocation10 + $0x14] sm:$0xf]
        %v626 = vld [vmem:[#allocation10 + $0x18] sm:$0xf]
        %v627 = vld [vmem:[#allocation10 + $0x1c] sm:$0xf]
        %v628 = vld [vmem:[#allocation10 + $0x20] sm:$0xf]
        %v629 = vld [vmem:[#allocation10 + $0x24] sm:$0xf]
        %v630 = vld [vmem:[#allocation10 + $0x28] sm:$0xf]
        %v631 = vld [vmem:[#allocation10 + $0x2c] sm:$0xf]
        %v632 = vld [vmem:[#allocation10 + $0x30] sm:$0xf]
        %v633 = vld [vmem:[#allocation10 + $0x34] sm:$0xf]
        %v634 = vld [vmem:[#allocation10 + $0x38] sm:$0xf]
        %v635 = vld [vmem:[#allocation10 + $0x3c] sm:$0xf]
        %v636 = vld [vmem:[%s6] sm:$0x1]
        %v638 = vperm.slane %v636, 0
        %v656 = vunpack.c.l.b16 %v620
        %v657 = vunpack.c.l.b16 %v621
        %v658 = vunpack.c.l.b16 %v622
        %v659 = vunpack.c.l.b16 %v623
        %v660 = vunpack.c.l.b16 %v624
        %v661 = vunpack.c.l.b16 %v625
        %v662 = vunpack.c.l.b16 %v626
        %v663 = vunpack.c.l.b16 %v627
        %v664 = vunpack.c.l.b16 %v628
        %v665 = vunpack.c.l.b16 %v629
        %v666 = vunpack.c.l.b16 %v630
        %v667 = vunpack.c.l.b16 %v631
        %v668 = vunpack.c.l.b16 %v632
        %v669 = vunpack.c.l.b16 %v633
        %v670 = vunpack.c.l.b16 %v634
        %v671 = vunpack.c.l.b16 %v635
        %v672 = vpack.c.b16 %v657, %v656
        %v673 = vpack.c.b16 %v659, %v658
        %v674 = vpack.c.b16 %v661, %v660
        %v675 = vpack.c.b16 %v663, %v662
        %v676 = vpack.c.b16 %v665, %v664
        %v677 = vpack.c.b16 %v667, %v666
        %v678 = vpack.c.b16 %v669, %v668
        %v679 = vpack.c.b16 %v671, %v670
        %688 = vmatpush.bf16.msra.mxu0 %v679
        %689 = vmatpush.bf16.msra.mxu0 %v678
        %690 = vmatpush.bf16.msra.mxu0 %v677
        %691 = vmatpush.bf16.msra.mxu0 %v676
        %692 = vmatpush.bf16.msra.mxu0 %v675
        %693 = vmatpush.bf16.msra.mxu0 %v674
        %694 = vmatpush.bf16.msra.mxu0 %v673
        %695 = vmatpush.bf16.msra.mxu0 %v672
        %696 = vmatmul.bf16.gmra.mxu0 %v619
        %v697 = vpop.f32.mrf.mxu0
        %v698 = vadd.f32 %v638, %v697
        %v699 = vpop.f32.mrf.mxu0
        %700 = vdwg.mxu0
        %v701 = vmax.f32 %v698, 0.0
        %v702 = vpack.c.bf16 %v701, %v701
        %v703 = vld [vmem:[#allocation11] sm:$0xf]
        %v704 = vld [vmem:[#allocation11 + $0x4] sm:$0xf]
        %v705 = vld [vmem:[#allocation11 + $0x8] sm:$0xf]
        %v706 = vld [vmem:[#allocation11 + $0xc] sm:$0xf]
        %v707 = vld [vmem:[#allocation11 + $0x10] sm:$0xf]
        %v708 = vld [vmem:[#allocation11 + $0x14] sm:$0xf]
        %v709 = vld [vmem:[#allocation11 + $0x18] sm:$0xf]
        %v710 = vld [vmem:[#allocation11 + $0x1c] sm:$0xf]
        %v711 = vld [vmem:[#allocation11 + $0x20] sm:$0xf]
        %v712 = vld [vmem:[#allocation11 + $0x24] sm:$0xf]
        %v713 = vld [vmem:[#allocation11 + $0x28] sm:$0xf]
        %v714 = vld [vmem:[#allocation11 + $0x2c] sm:$0xf]
        %v715 = vld [vmem:[#allocation11 + $0x30] sm:$0xf]
        %v716 = vld [vmem:[#allocation11 + $0x34] sm:$0xf]
        %v717 = vld [vmem:[#allocation11 + $0x38] sm:$0xf]
        %v718 = vld [vmem:[#allocation11 + $0x3c] sm:$0xf]
        %v719 = vld [vmem:[%s8] sm:$0x1]
        %v721 = vperm.slane %v719, 0
        %v739 = vunpack.c.l.b16 %v703
        %v740 = vunpack.c.l.b16 %v704
        %v741 = vunpack.c.l.b16 %v705
        %v742 = vunpack.c.l.b16 %v706
        %v743 = vunpack.c.l.b16 %v707
        %v744 = vunpack.c.l.b16 %v708
        %v745 = vunpack.c.l.b16 %v709
        %v746 = vunpack.c.l.b16 %v710
        %v747 = vunpack.c.l.b16 %v711
        %v748 = vunpack.c.l.b16 %v712
        %v749 = vunpack.c.l.b16 %v713
        %v750 = vunpack.c.l.b16 %v714
        %v751 = vunpack.c.l.b16 %v715
        %v752 = vunpack.c.l.b16 %v716
        %v753 = vunpack.c.l.b16 %v717
        %v754 = vunpack.c.l.b16 %v718
        %v755 = vpack.c.b16 %v740, %v739
        %v756 = vpack.c.b16 %v742, %v741
        %v757 = vpack.c.b16 %v744, %v743
        %v758 = vpack.c.b16 %v746, %v745
        %v759 = vpack.c.b16 %v748, %v747
        %v760 = vpack.c.b16 %v750, %v749
        %v761 = vpack.c.b16 %v752, %v751
        %v762 = vpack.c.b16 %v754, %v753
        %771 = vmatpush.bf16.msra.mxu0 %v762
        %772 = vmatpush.bf16.msra.mxu0 %v761
        %773 = vmatpush.bf16.msra.mxu0 %v760
        %774 = vmatpush.bf16.msra.mxu0 %v759
        %775 = vmatpush.bf16.msra.mxu0 %v758
        %776 = vmatpush.bf16.msra.mxu0 %v757
        %777 = vmatpush.bf16.msra.mxu0 %v756
        %778 = vmatpush.bf16.msra.mxu0 %v755
        %779 = vmatmul.bf16.gmra.mxu0 %v702
        %v780 = vpop.f32.mrf.mxu0
        %v781 = vadd.f32 %v721, %v780
        %v782 = vpop.f32.mrf.mxu0
        %783 = vdwg.mxu0
        %784 = vst [vmem:[%s454] sm:$0xff] %v781
        %s785 = sand.u32 %s238, 1
        %s786 = scalar_lea.sflag [#allocation4], %s785
        %s787 = sand.u32 %s238, 1
        %s788 = smul.addr %s787, 8
        %s789 = scalar_lea.vmem [#allocation13], %s788
        // Predicated region
        $region81: #{tpu_custom_call.1} parent=55 // pred_check
          %p790 = pneg %p248
        $region82: #{tpu_custom_call.1} parent=55 // pred_check_branch
          %792 = sbr.rel (%p790) target = $region84
        $region83: #{tpu_custom_call.1} parent=55 // pred_region
          %794 = vsyncadd %s786, 0
          %s795 = smul.addr %s31, 8
          %s796 = scalar_lea.hbm %s9, %s795
          %s798 = sshll.u32 %s789, 4
          %s799 = int_to_ptr.vmem [resolvable:$true] %s798
          %s800 = sshll.u32 %s796, 4
          %s801 = int_to_ptr.hbm [resolvable:$true] %s800
          %803 = dma.vmem_to_hbm [thread:$0]  %s799, 128, %s801, %s786
        $region84: #{tpu_custom_call.1} parent=55 // pred_fallthru
          _
      $region56: #{tpu_custom_call.1} parent=5 // pred_fallthru
        _
      %p804 = scmp.le.s32.totalorder 2, %s26
      // Predicated region
      $region85: #{tpu_custom_call.1} parent=5 // pred_check
        %p805 = pneg %p804
      $region86: #{tpu_custom_call.1} parent=5 // pred_check_branch
        %807 = sbr.rel (%p805) target = $region88
      $region87: #{tpu_custom_call.1} parent=5 // pred_region
        %s808 = ssub.s32 %s26, 2
        // Predicated region
        $region89: #{tpu_custom_call.1} parent=87 // pred_check
          %p809 = pneg %p254
        $region90: #{tpu_custom_call.1} parent=87 // pred_check_branch
          %811 = sbr.rel (%p809) target = $region92
        $region91: #{tpu_custom_call.1} parent=87 // pred_region
          %s812 = sand.u32 %s239, 1
          %s813 = scalar_lea.sflag [#allocation4], %s812
          %s814 = sand.u32 %s239, 1
          %s815 = smul.addr %s814, 8
          %s816 = scalar_lea.vmem [#allocation13], %s815
          %818 = dma.done %s813, 128
        $region92: #{tpu_custom_call.1} parent=87 // pred_fallthru
          _
      $region88: #{tpu_custom_call.1} parent=5 // pred_fallthru
        _
    $region6: #{tpu_custom_call.1} parent=1 // loop_footer
      %s30 = sadd.s32 1, %s26
    $region7: #{tpu_custom_call.1} parent=1 // loop_footer_branch
      %25 = sbr.rel target = $region3
    $region8: #{tpu_custom_call.1} parent=1 // loop_exit
      _
    %819 = vsyncpa [#allocation3], 1
    %s820 = scalar_lea.sflag [#allocation3], 1
    %821 = vsyncpa %s820, 1
    %822 = vsyncpa [#allocation6], 1
    %s823 = scalar_lea.sflag [#allocation6], 1
    %824 = vsyncpa %s823, 1
    %825 = vsyncpa [#allocation9], 1
    %826 = vsyncpa [#allocation12], 1
    %827 = vsyncpa [#allocation4], 1
    %s828 = scalar_lea.sflag [#allocation4], 1
    %829 = vsyncpa %s828, 1

</llo_original>
